<compile_context>
chip_gen: v5e
topology: v5e:2x2
jax: 0.10.0
libtpu: 0.0.40
codegen_flags: <defaults>
</compile_context>

<pallas_src>
import functools

import jax
import jax.numpy as jnp
from jax import lax
from jax.experimental import pallas as pl
from jax.experimental.pallas import tpu as pltpu


# ----------------------------- model config ---------------------------------
B = 2                    # batch
N = 16                   # nodes -> edge_mtx is (B, N, N)
IN_DIM = N * N           # 256
HIDDEN_DIM = 32          # logical hidden width of the placeholder MLPs
HIDDEN_PAD = 128         # lane-dense padded hidden width (zero padding, math-identical)
CLUSTER_NUMBER = 8       # C
EMBEDDING_DIM = 16       # D
NUM_EMBEDDINGS = 32      # K
COMMITMENT_COST = 0.25
Z_DIM = CLUSTER_NUMBER * EMBEDDING_DIM       # 128 (lane-dense latent)
CK = CLUSTER_NUMBER * NUM_EMBEDDINGS         # 256 (lane-dense distance width)

F32 = jnp.float32
_SCAL_LANES = 128        # packed scalar-output width (one unmasked 128-wide store)


# ------------------------- fused encoder+VQ+decoder kernel -------------------
def fused_vqgae_kernel(edge_ref, ew1_ref, eb1_ref, ew2_ref, eb2_ref,
                       w_ref, esq_ref,
                       dw1_ref, db1_ref, dw2_ref, db2_ref,
                       xr_ref, z_ref, scal_ref,
                       *, commitment_cost, cluster_number, embedding_dim,
                       num_embeddings):
    C, D, K = cluster_number, embedding_dim, num_embeddings
    x = edge_ref[...]                                   # (B, N*N)
    bsz = x.shape[0]
    m = bsz * C                                         # rows fed to the VQ (16)

    # ---------------- encoder MLP: edge -> z (B, C*D) ----------------
    h = jnp.dot(x, ew1_ref[...], preferred_element_type=F32) + eb1_ref[...]
    h = jnp.maximum(h, 0.0)
    z = jnp.dot(h, ew2_ref[...], preferred_element_type=F32) + eb2_ref[...]
    z_ref[...] = z                                      # lane-dense latent output

    # ---------------- vector quantizer (decay=0 path) ----------------
    # W is the block-diagonal codebook: W[c*D+d, c*K+k] = e[k, d].
    w = w_ref[...]                                      # (C*D, C*K) = (128, 256)
    cross = jnp.dot(z, w, preferred_element_type=F32)   # (B, C*K): <z_c, e_k> per block

    # |z_c|^2 is constant within each K-block -> argmin-invariant -> dropped.
    # dist is only used for the argmin (losses use quant vs. z), so this is exact.
    dist = esq_ref[...] - 2.0 * cross                   # (B, C*K)

    # Segmented argmin per 32-lane cluster block, first-index tie-break
    # (matches torch.argmin + scatter_). 2 XLU reductions total.
    d3 = dist.reshape(bsz, C, K)                        # (B, C, K)
    iota_k = lax.broadcasted_iota(jnp.int32, (bsz, C, K), 2)
    min_d = jnp.min(d3, axis=-1, keepdims=True)
    idx = jnp.min(jnp.where(d3 <= min_d, iota_k, K), axis=-1, keepdims=True)
    enc3 = (iota_k == idx).astype(F32)                  # (B, C, K) one-hot encodings

    # Codebook lookup straight back into the lane-dense (B, C*D) layout.
    enc = enc3.reshape(bsz, C * K)                      # (B, C*K)
    quant = lax.dot_general(enc, w,
                            dimension_numbers=(((1,), (1,)), ((), ())),
                            preferred_element_type=F32)  # (B, C*D)

    diff = quant - z
    mse = jnp.mean(diff * diff)
    # e_latent_loss == q_latent_loss numerically (detach only affects gradients).
    vq_loss = (1.0 + commitment_cost) * mse

    cnt = jnp.sum(enc3, axis=0)                         # (C, K)
    avg = jnp.sum(cnt, axis=0, keepdims=True) * (1.0 / m)   # (1, K) = avg_probs
    perplexity = jnp.exp(-jnp.sum(avg * jnp.log(avg + 1e-10)))

    # ---------- decoder MLP on the straight-through quantized latent ----------
    hd = jnp.dot(quant, dw1_ref[...], preferred_element_type=F32) + db1_ref[...]
    hd = jnp.maximum(hd, 0.0)
    xr = jnp.dot(hd, dw2_ref[...], preferred_element_type=F32) + db2_ref[...]
    xr_ref[...] = xr                                    # (B, N*N)

    recon_loss = jnp.mean(jnp.abs(xr - x))              # nn.L1Loss, mean reduction

    # Pack the three scalars into one lane-dense vector (single 128-wide store).
    s_lane = lax.broadcasted_iota(jnp.int32, (1, _SCAL_LANES), 1)
    scal_ref[...] = jnp.where(s_lane == 0, vq_loss,
                    jnp.where(s_lane == 1, recon_loss,
                    jnp.where(s_lane == 2, perplexity, 0.0)))


def fused_forward(edge_flat, params):
    bsz = edge_flat.shape[0]

    # Pure parameter transforms (tiny, fused/const-folded by XLA outside the kernel):
    # block-diagonal codebook W (C*D, C*K) and tiled |e_k|^2 row (1, C*K).
    e = params["codebook"]                                            # (K, D)
    w_blockdiag = jnp.kron(jnp.eye(CLUSTER_NUMBER, dtype=F32), e.T)   # (128, 256)
    e_sq = jnp.tile(jnp.sum(e * e, axis=1), CLUSTER_NUMBER)[None, :]  # (1, 256)

    kern = functools.partial(
        fused_vqgae_kernel,
        commitment_cost=COMMITMENT_COST,
        cluster_number=CLUSTER_NUMBER,
        embedding_dim=EMBEDDING_DIM,
        num_embeddings=NUM_EMBEDDINGS)
    vmem = pltpu.MemorySpace.VMEM
    xr, z, scal = pl.pallas_call(
        kern,
        in_specs=[pl.BlockSpec(memory_space=vmem) for _ in range(11)],
        out_specs=(pl.BlockSpec(memory_space=vmem),
                   pl.BlockSpec(memory_space=vmem),
                   pl.BlockSpec(memory_space=vmem)),
        out_shape=(jax.ShapeDtypeStruct((bsz, IN_DIM), F32),
                   jax.ShapeDtypeStruct((bsz, Z_DIM), F32),
                   jax.ShapeDtypeStruct((1, _SCAL_LANES), F32)),
    )(edge_flat,
      params["enc_w1"], params["enc_b1"], params["enc_w2"], params["enc_b2"],
      w_blockdiag, e_sq,
      params["dec_w1"], params["dec_b1"], params["dec_w2"], params["dec_b2"])
    return xr, z, scal


# ------------------------------ parameter init -------------------------------
def init_params(key):
    ks = jax.random.split(key, 5)
    scale = 0.1

    def pad_cols(w):   # hidden padding 32 -> 128 (zero columns, inert through ReLU)
        return jnp.pad(w, ((0, 0), (0, HIDDEN_PAD - w.shape[1])))

    def pad_rows(w):   # matching zero rows for the padded hidden units
        return jnp.pad(w, ((0, HIDDEN_PAD - w.shape[0]), (0, 0)))

    params = {
        # encoder: (B, N*N) -> hidden(32, padded to 128) -> (B, cluster*embed)
        "enc_w1": pad_cols(scale * jax.random.normal(ks[0], (IN_DIM, HIDDEN_DIM), F32)),
        "enc_b1": jnp.zeros((1, HIDDEN_PAD), F32),
        "enc_w2": pad_rows(scale * jax.random.normal(ks[1], (HIDDEN_DIM, Z_DIM), F32)),
        "enc_b2": jnp.zeros((1, Z_DIM), F32),
        # VQ codebook: uniform(-1/K, 1/K), same as nn.Embedding init in the module
        "codebook": jax.random.uniform(
            ks[2], (NUM_EMBEDDINGS, EMBEDDING_DIM), F32,
            minval=-1.0 / NUM_EMBEDDINGS, maxval=1.0 / NUM_EMBEDDINGS),
        # decoder: (B, cluster*embed) -> hidden(32, padded to 128) -> (B, N*N)
        "dec_w1": pad_cols(scale * jax.random.normal(ks[3], (Z_DIM, HIDDEN_DIM), F32)),
        "dec_b1": jnp.zeros((1, HIDDEN_PAD), F32),
        "dec_w2": pad_rows(scale * jax.random.normal(ks[4], (HIDDEN_DIM, IN_DIM), F32)),
        "dec_b2": jnp.zeros((1, IN_DIM), F32),
    }
    return params


# -------------------------------- forward ------------------------------------
@jax.jit
def vq_gae_forward(params, edge_mtx):
    b, n, _ = edge_mtx.shape
    edge_flat = edge_mtx.reshape(b, n * n)

    xr_flat, z_flat, scal = fused_forward(edge_flat, params)

    x_recon = xr_flat.reshape(b, n, n)
    z = z_flat.reshape(b, CLUSTER_NUMBER, EMBEDDING_DIM)
    vq_loss = scal[0, 0]
    recon_loss = scal[0, 1]
    perplexity = scal[0, 2]

    loss = {"loss": recon_loss + vq_loss,
            "rec_loss": recon_loss,
            "kl_loss": vq_loss}
    return loss, x_recon, z, perplexity


# --------------------------------- main ---------------------------------------
if __name__ == "__main__":
    key = jax.random.PRNGKey(0)
    k_param, k_data = jax.random.split(key)

    params = init_params(k_param)
    edge_mtx = jax.random.uniform(k_data, (B, N, N), F32)

    loss, x_recon, z, perplexity = vq_gae_forward(params, edge_mtx)
    jax.block_until_ready((loss, x_recon, z, perplexity))

    ok = (jnp.isfinite(loss["loss"]) & jnp.isfinite(loss["rec_loss"])
          & jnp.isfinite(loss["kl_loss"]) & jnp.isfinite(perplexity)
          & jnp.all(jnp.isfinite(x_recon)) & jnp.all(jnp.isfinite(z)))
    assert bool(ok), "non-finite outputs"
    assert x_recon.shape == (B, N, N)
    assert z.shape == (B, CLUSTER_NUMBER, EMBEDDING_DIM)
    print("KERNEL_OK")
</pallas_src>

<mosaic_0001>
module attributes {stable_mosaic.version = 11 : i64} {
  func.func @fused_vqgae_kernel(%arg0: memref<2x256xf32, #tpu.memory_space<vmem>>, %arg1: memref<256x128xf32, #tpu.memory_space<vmem>>, %arg2: memref<1x128xf32, #tpu.memory_space<vmem>>, %arg3: memref<128x128xf32, #tpu.memory_space<vmem>>, %arg4: memref<1x128xf32, #tpu.memory_space<vmem>>, %arg5: memref<128x256xf32, #tpu.memory_space<vmem>>, %arg6: memref<1x256xf32, #tpu.memory_space<vmem>>, %arg7: memref<128x128xf32, #tpu.memory_space<vmem>>, %arg8: memref<1x128xf32, #tpu.memory_space<vmem>>, %arg9: memref<128x256xf32, #tpu.memory_space<vmem>>, %arg10: memref<1x256xf32, #tpu.memory_space<vmem>>, %arg11: memref<2x256xf32, #tpu.memory_space<vmem>>, %arg12: memref<2x128xf32, #tpu.memory_space<vmem>>, %arg13: memref<1x128xf32, #tpu.memory_space<vmem>>) attributes {dimension_semantics = [], scalar_prefetch = 0 : i64, scratch_operands = 0 : i64, tpu.core_type = #tpu.core_type<tc>} {
    %c0 = arith.constant 0 : index
    %c0_0 = arith.constant 0 : index
    %0 = vector.load %arg0[%c0, %c0_0] : memref<2x256xf32, #tpu.memory_space<vmem>>, vector<2x256xf32>
    %c0_1 = arith.constant 0 : index
    %c0_2 = arith.constant 0 : index
    %1 = vector.load %arg1[%c0_1, %c0_2] : memref<256x128xf32, #tpu.memory_space<vmem>>, vector<256x128xf32>
    %cst = arith.constant dense<0.000000e+00> : vector<2x128xf32>
    %2 = tpu.matmul %0, %1, %cst {dimension_numbers = #tpu.dot_dimension_numbers<[1], [0], [0], [1], [0, 0, 1, 1], [], []>} : vector<2x256xf32>, vector<256x128xf32>, vector<2x128xf32> -> vector<2x128xf32>
    %c0_3 = arith.constant 0 : index
    %c0_4 = arith.constant 0 : index
    %3 = vector.load %arg2[%c0_3, %c0_4] : memref<1x128xf32, #tpu.memory_space<vmem>>, vector<1x128xf32>
    %4 = vector.broadcast %3 : vector<1x128xf32> to vector<2x128xf32>
    %5 = arith.addf %2, %4 : vector<2x128xf32>
    %cst_5 = arith.constant 0.000000e+00 : f32
    %6 = vector.broadcast %cst_5 : f32 to vector<2x128xf32>
    %7 = arith.maximumf %5, %6 : vector<2x128xf32>
    %c0_6 = arith.constant 0 : index
    %c0_7 = arith.constant 0 : index
    %8 = vector.load %arg3[%c0_6, %c0_7] : memref<128x128xf32, #tpu.memory_space<vmem>>, vector<128x128xf32>
    %cst_8 = arith.constant dense<0.000000e+00> : vector<2x128xf32>
    %9 = tpu.matmul %7, %8, %cst_8 {dimension_numbers = #tpu.dot_dimension_numbers<[1], [0], [0], [1], [0, 0, 1, 1], [], []>} : vector<2x128xf32>, vector<128x128xf32>, vector<2x128xf32> -> vector<2x128xf32>
    %c0_9 = arith.constant 0 : index
    %c0_10 = arith.constant 0 : index
    %10 = vector.load %arg4[%c0_9, %c0_10] : memref<1x128xf32, #tpu.memory_space<vmem>>, vector<1x128xf32>
    %11 = vector.broadcast %10 : vector<1x128xf32> to vector<2x128xf32>
    %12 = arith.addf %9, %11 : vector<2x128xf32>
    %c0_11 = arith.constant 0 : index
    %c0_12 = arith.constant 0 : index
    %13 = vector.load %arg12[%c0_11, %c0_12] : memref<2x128xf32, #tpu.memory_space<vmem>>, vector<2x128xf32>
    tpu.vector_store %arg12[%c0_11, %c0_12], %12 {strides = array<i32>} : memref<2x128xf32, #tpu.memory_space<vmem>>, vector<2x128xf32>,
    %c0_13 = arith.constant 0 : index
    %c0_14 = arith.constant 0 : index
    %14 = vector.load %arg5[%c0_13, %c0_14] : memref<128x256xf32, #tpu.memory_space<vmem>>, vector<128x256xf32>
    %cst_15 = arith.constant dense<0.000000e+00> : vector<2x256xf32>
    %15 = tpu.matmul %12, %14, %cst_15 {dimension_numbers = #tpu.dot_dimension_numbers<[1], [0], [0], [1], [0, 0, 1, 1], [], []>} : vector<2x128xf32>, vector<128x256xf32>, vector<2x256xf32> -> vector<2x256xf32>
    %c0_16 = arith.constant 0 : index
    %c0_17 = arith.constant 0 : index
    %16 = vector.load %arg6[%c0_16, %c0_17] : memref<1x256xf32, #tpu.memory_space<vmem>>, vector<1x256xf32>
    %cst_18 = arith.constant 2.000000e+00 : f32
    %17 = vector.broadcast %cst_18 : f32 to vector<2x256xf32>
    %18 = arith.mulf %17, %15 : vector<2x256xf32>
    %19 = vector.broadcast %16 : vector<1x256xf32> to vector<2x256xf32>
    %20 = arith.subf %19, %18 : vector<2x256xf32>
    %21 = vector.shape_cast %20 : vector<2x256xf32> to vector<2x8x32xf32>
    %22 = tpu.iota {dimensions = array<i32: 2>} : vector<2x8x32xi32>
    %cst_19 = arith.constant dense<0x7F800000> : vector<2x8xf32>
    %23 = vector.multi_reduction <minimumf>, %21, %cst_19 [2] : vector<2x8x32xf32> to vector<2x8xf32>
    %24 = vector.shape_cast %23 : vector<2x8xf32> to vector<2x8x1xf32>
    %25 = vector.broadcast %24 : vector<2x8x1xf32> to vector<2x8x32xf32>
    %26 = arith.cmpf ole, %21, %25 : vector<2x8x32xf32>
    %c32_i32 = arith.constant 32 : i32
    %27 = vector.broadcast %c32_i32 : i32 to vector<2x8x32xi32>
    %28 = arith.select %26, %22, %27 : vector<2x8x32xi1>, vector<2x8x32xi32>
    %cst_20 = arith.constant dense<2147483647> : vector<2x8xi32>
    %29 = vector.multi_reduction <minsi>, %28, %cst_20 [2] : vector<2x8x32xi32> to vector<2x8xi32>
    %30 = vector.shape_cast %29 : vector<2x8xi32> to vector<2x8x1xi32>
    %31 = vector.broadcast %30 : vector<2x8x1xi32> to vector<2x8x32xi32>
    %32 = arith.cmpi eq, %22, %31 : vector<2x8x32xi32>
    %33 = arith.extui %32 : vector<2x8x32xi1> to vector<2x8x32xi32>
    %34 = arith.sitofp %33 : vector<2x8x32xi32> to vector<2x8x32xf32>
    %35 = vector.shape_cast %34 : vector<2x8x32xf32> to vector<2x256xf32>
    %cst_21 = arith.constant dense<0.000000e+00> : vector<2x128xf32>
    %36 = tpu.matmul %35, %14, %cst_21 {dimension_numbers = #tpu.dot_dimension_numbers<[1], [1], [0], [0], [0, 0, 1, 0], [], []>} : vector<2x256xf32>, vector<128x256xf32>, vector<2x128xf32> -> vector<2x128xf32>
    %37 = arith.subf %36, %12 : vector<2x128xf32>
    %38 = arith.mulf %37, %37 : vector<2x128xf32>
    %39 = vector.shape_cast %38 : vector<2x128xf32> to vector<1x2x128xf32>
    %cst_22 = arith.constant dense<0.000000e+00> : vector<1xf32>
    %40 = vector.multi_reduction <add>, %39, %cst_22 [1, 2] : vector<1x2x128xf32> to vector<1xf32>
    %41 = vector.shape_cast %40 : vector<1xf32> to vector<1x1x1xf32>
    %42 = vector.extract %41[0, 0, 0] : f32 from vector<1x1x1xf32>
    %cst_23 = arith.constant 2.560000e+02 : f32
    %43 = arith.divf %42, %cst_23 : f32
    %cst_24 = arith.constant 1.250000e+00 : f32
    %44 = arith.mulf %cst_24, %43 : f32
    %cst_25 = arith.constant dense<0.000000e+00> : vector<8x32xf32>
    %45 = vector.multi_reduction <add>, %34, %cst_25 [0] : vector<2x8x32xf32> to vector<8x32xf32>
    %cst_26 = arith.constant dense<0.000000e+00> : vector<32xf32>
    %46 = vector.multi_reduction <add>, %45, %cst_26 [0] : vector<8x32xf32> to vector<32xf32>
    %47 = vector.shape_cast %46 : vector<32xf32> to vector<1x32xf32>
    %cst_27 = arith.constant 6.250000e-02 : f32
    %48 = vector.broadcast %cst_27 : f32 to vector<1x32xf32>
    %49 = arith.mulf %47, %48 : vector<1x32xf32>
    %cst_28 = arith.constant 1.000000e-10 : f32
    %50 = vector.broadcast %cst_28 : f32 to vector<1x32xf32>
    %51 = arith.addf %49, %50 : vector<1x32xf32>
    %52 = math.log %51 : vector<1x32xf32>
    %53 = arith.mulf %49, %52 : vector<1x32xf32>
    %54 = vector.shape_cast %53 : vector<1x32xf32> to vector<1x1x32xf32>
    %cst_29 = arith.constant dense<0.000000e+00> : vector<1xf32>
    %55 = vector.multi_reduction <add>, %54, %cst_29 [1, 2] : vector<1x1x32xf32> to vector<1xf32>
    %56 = vector.shape_cast %55 : vector<1xf32> to vector<1x1x1xf32>
    %57 = vector.extract %56[0, 0, 0] : f32 from vector<1x1x1xf32>
    %cst_30 = arith.constant 0.000000e+00 : f32
    %58 = arith.subf %cst_30, %57 : f32
    %59 = math.exp %58 : f32
    %c0_31 = arith.constant 0 : index
    %c0_32 = arith.constant 0 : index
    %60 = vector.load %arg7[%c0_31, %c0_32] : memref<128x128xf32, #tpu.memory_space<vmem>>, vector<128x128xf32>
    %cst_33 = arith.constant dense<0.000000e+00> : vector<2x128xf32>
    %61 = tpu.matmul %36, %60, %cst_33 {dimension_numbers = #tpu.dot_dimension_numbers<[1], [0], [0], [1], [0, 0, 1, 1], [], []>} : vector<2x128xf32>, vector<128x128xf32>, vector<2x128xf32> -> vector<2x128xf32>
    %c0_34 = arith.constant 0 : index
    %c0_35 = arith.constant 0 : index
    %62 = vector.load %arg8[%c0_34, %c0_35] : memref<1x128xf32, #tpu.memory_space<vmem>>, vector<1x128xf32>
    %63 = vector.broadcast %62 : vector<1x128xf32> to vector<2x128xf32>
    %64 = arith.addf %61, %63 : vector<2x128xf32>
    %cst_36 = arith.constant 0.000000e+00 : f32
    %65 = vector.broadcast %cst_36 : f32 to vector<2x128xf32>
    %66 = arith.maximumf %64, %65 : vector<2x128xf32>
    %c0_37 = arith.constant 0 : index
    %c0_38 = arith.constant 0 : index
    %67 = vector.load %arg9[%c0_37, %c0_38] : memref<128x256xf32, #tpu.memory_space<vmem>>, vector<128x256xf32>
    %cst_39 = arith.constant dense<0.000000e+00> : vector<2x256xf32>
    %68 = tpu.matmul %66, %67, %cst_39 {dimension_numbers = #tpu.dot_dimension_numbers<[1], [0], [0], [1], [0, 0, 1, 1], [], []>} : vector<2x128xf32>, vector<128x256xf32>, vector<2x256xf32> -> vector<2x256xf32>
    %c0_40 = arith.constant 0 : index
    %c0_41 = arith.constant 0 : index
    %69 = vector.load %arg10[%c0_40, %c0_41] : memref<1x256xf32, #tpu.memory_space<vmem>>, vector<1x256xf32>
    %70 = vector.broadcast %69 : vector<1x256xf32> to vector<2x256xf32>
    %71 = arith.addf %68, %70 : vector<2x256xf32>
    %c0_42 = arith.constant 0 : index
    %c0_43 = arith.constant 0 : index
    %72 = vector.load %arg11[%c0_42, %c0_43] : memref<2x256xf32, #tpu.memory_space<vmem>>, vector<2x256xf32>
    tpu.vector_store %arg11[%c0_42, %c0_43], %71 {strides = array<i32>} : memref<2x256xf32, #tpu.memory_space<vmem>>, vector<2x256xf32>,
    %73 = arith.subf %71, %0 : vector<2x256xf32>
    %74 = math.absf %73 : vector<2x256xf32>
    %75 = vector.shape_cast %74 : vector<2x256xf32> to vector<1x2x256xf32>
    %cst_44 = arith.constant dense<0.000000e+00> : vector<1xf32>
    %76 = vector.multi_reduction <add>, %75, %cst_44 [1, 2] : vector<1x2x256xf32> to vector<1xf32>
    %77 = vector.shape_cast %76 : vector<1xf32> to vector<1x1x1xf32>
    %78 = vector.extract %77[0, 0, 0] : f32 from vector<1x1x1xf32>
    %cst_45 = arith.constant 5.120000e+02 : f32
    %79 = arith.divf %78, %cst_45 : f32
    %80 = tpu.iota {dimensions = array<i32: 1>} : vector<1x128xi32>
    %c0_i32 = arith.constant 0 : i32
    %81 = vector.broadcast %c0_i32 : i32 to vector<1x128xi32>
    %82 = arith.cmpi eq, %80, %81 : vector<1x128xi32>
    %c1_i32 = arith.constant 1 : i32
    %83 = vector.broadcast %c1_i32 : i32 to vector<1x128xi32>
    %84 = arith.cmpi eq, %80, %83 : vector<1x128xi32>
    %c2_i32 = arith.constant 2 : i32
    %85 = vector.broadcast %c2_i32 : i32 to vector<1x128xi32>
    %86 = arith.cmpi eq, %80, %85 : vector<1x128xi32>
    %cst_46 = arith.constant 0.000000e+00 : f32
    %87 = vector.broadcast %59 : f32 to vector<1x128xf32>
    %88 = vector.broadcast %cst_46 : f32 to vector<1x128xf32>
    %89 = arith.select %86, %87, %88 : vector<1x128xi1>, vector<1x128xf32>
    %90 = vector.broadcast %79 : f32 to vector<1x128xf32>
    %91 = arith.select %84, %90, %89 : vector<1x128xi1>, vector<1x128xf32>
    %92 = vector.broadcast %44 : f32 to vector<1x128xf32>
    %93 = arith.select %82, %92, %91 : vector<1x128xi1>, vector<1x128xf32>
    %c0_47 = arith.constant 0 : index
    %c0_48 = arith.constant 0 : index
    %94 = vector.load %arg13[%c0_47, %c0_48] : memref<1x128xf32, #tpu.memory_space<vmem>>, vector<1x128xf32>
    tpu.vector_store %arg13[%c0_47, %c0_48], %93 {strides = array<i32>} : memref<1x128xf32, #tpu.memory_space<vmem>>, vector<1x128xf32>,
    return
  }
}

</mosaic_0001>

<llo_original>
// kernel: tile.9
$region0: #{tile.9}
  %s0 = inlined_call_operand.vmem [shape: f32[8,32], index: 0, kind: input, shape index: {}]
  %s1 = inlined_call_operand.vmem [shape: f32[1,256], index: 1, kind: output, shape index: {}]
  $region1: #{tile.9} parent=0
    #allocation0 [shape = 'u8[8192]{0}', space=vmem, size = 0x2000, scoped, tag = 'scoped mem for output reshape']
    %s2 = smov 3
    %v3 = vld [vmem:[%s0] ss:$4 sm:%s2]
    %vm4 = vcmask 261120
    %5 = vst.msk [vmem:[#allocation0] ss:$8 sm:$0x3] %vm4, %v3
    %s6 = scalar_lea.vmem %s0, 3
    %s7 = smov 3
    %v8 = vld [vmem:[%s6] ss:$4 sm:%s7]
    %9 = vrot.lane.b32.xlu0 %v8, 96
    %v10 = vpop.permute.xlu0 %9
    %vm11 = vcmask 1048320
    %12 = vst.msk [vmem:[#allocation0] ss:$8 sm:$0x3] %vm11, %v10
    %s13 = scalar_lea.vmem %s0, 2
    %s14 = smov 3
    %v15 = vld [vmem:[%s13] ss:$4 sm:%s14]
    %16 = vrot.lane.b32.xlu0 %v15, 64
    %v17 = vpop.permute.xlu0 %16
    %vm18 = vcmask 785920
    %19 = vst.msk [vmem:[#allocation0] ss:$8 sm:$0x3] %vm18, %v17
    %s20 = scalar_lea.vmem %s0, 1
    %s21 = smov 3
    %v22 = vld [vmem:[%s20] ss:$4 sm:%s21]
    %23 = vrot.lane.b32.xlu0 %v22, 32
    %v24 = vpop.permute.xlu0 %23
    %vm25 = vcmask 523520
    %26 = vst.msk [vmem:[#allocation0] ss:$8 sm:$0x3] %vm25, %v24
    %s28 = ssub.s32 2, 1
    %v29 = vld [vmem:[#allocation0] sm:%s28]
    %s31 = ssub.s32 2, 1
    %32 = vst [vmem:[%s1] sm:%s31] %v29
    %s33 = scalar_lea.vmem [#allocation0], 8
    %v34 = vld [vmem:[%s33] sm:%s28]
    %s36 = ssub.s32 2, 1
    %s37 = scalar_lea.vmem %s1, 1
    %38 = vst [vmem:[%s37] sm:%s36] %v34

// kernel: tile.8
$region0: #{tile.8}
  #allocation0 [shape = 's32[1]{0}', space=sflag, size = 0x4, scoped, tag = 'scoped memory for tile.8']
  %s0 = inlined_call_operand.vmem [shape: f32[32], index: 0, kind: input, shape index: {}]
  %s1 = inlined_call_operand.vmem [shape: f32[8,32], index: 1, kind: output, shape index: {}]
  // Predicated region
  $region2: #{tile.8} parent=0 // pred_check
    _
  $region3: #{tile.8} parent=0 // pred_check_branch
    %3 = sbr.rel (0) target = $region5
  $region4: #{tile.8} parent=0 // pred_region
    _
  $region5: #{tile.8} parent=0 // pred_fallthru
    _
  %v4 = vld [vmem:[%s0] ss:$0 sm:$0xff]
  %5 = vst [vmem:[%s1] sm:$0xff] %v4

// kernel: vq_gae_forward.1
$region0: #{vq_gae_forward.1}
  #allocation0 [shape = 'u32[]', space=smem, size = 0x4, offset = 0x4, fixed_abs, tag = 'smem constant byte address 0x4 - core index']
  #allocation1 [shape = 'u32[72,128]{1,0:T(1,128)}', space=vmem, size = 0x9000, scoped, tag = 'internal scratch']
  %s0 = inlined_call_operand.vmem [shape: f32[2,256], index: 0, kind: input, shape index: {}]
  %s1 = inlined_call_operand.vmem [shape: f32[256,128], index: 1, kind: input, shape index: {}]
  %s2 = inlined_call_operand.vmem [shape: f32[1,128], index: 2, kind: input, shape index: {}]
  %s3 = inlined_call_operand.vmem [shape: f32[128,128], index: 3, kind: input, shape index: {}]
  %s4 = inlined_call_operand.vmem [shape: f32[1,128], index: 4, kind: input, shape index: {}]
  %s5 = inlined_call_operand.vmem [shape: f32[128,256], index: 5, kind: input, shape index: {}]
  %s6 = inlined_call_operand.vmem [shape: f32[1,256], index: 6, kind: input, shape index: {}]
  %s7 = inlined_call_operand.vmem [shape: f32[128,128], index: 7, kind: input, shape index: {}]
  %s8 = inlined_call_operand.vmem [shape: f32[1,128], index: 8, kind: input, shape index: {}]
  %s9 = inlined_call_operand.vmem [shape: f32[128,256], index: 9, kind: input, shape index: {}]
  %s10 = inlined_call_operand.vmem [shape: f32[1,256], index: 10, kind: input, shape index: {}]
  %s11 = inlined_call_operand.vmem [shape: f32[2,256], index: 11, kind: output, shape index: {0}]
  %s12 = inlined_call_operand.vmem [shape: f32[2,128], index: 12, kind: output, shape index: {1}]
  %s13 = inlined_call_operand.vmem [shape: f32[1,128], index: 13, kind: output, shape index: {2}]
  %14 = xla_tuple %s11, %s12, %s13
  %s15 = sld [smem:[#allocation0]]
  $region70: #{vq_gae_forward.1} parent=0
    _
  %s17 = ssub.s32 1, %s15
  %s18 = scalar_select 0, %s17, %s15
  // Predicated region
  $region2: #{vq_gae_forward.1} parent=0 // pred_check
    _
  $region3: #{vq_gae_forward.1} parent=0 // pred_check_branch
    %20 = sbr.rel (0) target = $region5
  $region4: #{vq_gae_forward.1} parent=0 // pred_region
    _
  $region5: #{vq_gae_forward.1} parent=0 // pred_fallthru
    _
  // Predicated region
  $region6: #{vq_gae_forward.1} parent=0 // pred_check
    _
  $region7: #{vq_gae_forward.1} parent=0 // pred_check_branch
    %22 = sbr.rel (0) target = $region9
  $region8: #{vq_gae_forward.1} parent=0 // pred_region
    _
  $region9: #{vq_gae_forward.1} parent=0 // pred_fallthru
    _
  // Predicated region
  $region10: #{vq_gae_forward.1} parent=0 // pred_check
    _
  $region11: #{vq_gae_forward.1} parent=0 // pred_check_branch
    %24 = sbr.rel (0) target = $region13
  $region12: #{vq_gae_forward.1} parent=0 // pred_region
    _
  $region13: #{vq_gae_forward.1} parent=0 // pred_fallthru
    _
  // Predicated region
  $region14: #{vq_gae_forward.1} parent=0 // pred_check
    _
  $region15: #{vq_gae_forward.1} parent=0 // pred_check_branch
    %26 = sbr.rel (0) target = $region17
  $region16: #{vq_gae_forward.1} parent=0 // pred_region
    _
  $region17: #{vq_gae_forward.1} parent=0 // pred_fallthru
    _
  // Predicated region
  $region18: #{vq_gae_forward.1} parent=0 // pred_check
    _
  $region19: #{vq_gae_forward.1} parent=0 // pred_check_branch
    %28 = sbr.rel (0) target = $region21
  $region20: #{vq_gae_forward.1} parent=0 // pred_region
    _
  $region21: #{vq_gae_forward.1} parent=0 // pred_fallthru
    _
  // Predicated region
  $region22: #{vq_gae_forward.1} parent=0 // pred_check
    _
  $region23: #{vq_gae_forward.1} parent=0 // pred_check_branch
    %30 = sbr.rel (0) target = $region25
  $region24: #{vq_gae_forward.1} parent=0 // pred_region
    _
  $region25: #{vq_gae_forward.1} parent=0 // pred_fallthru
    _
  // Predicated region
  $region26: #{vq_gae_forward.1} parent=0 // pred_check
    _
  $region27: #{vq_gae_forward.1} parent=0 // pred_check_branch
    %32 = sbr.rel (0) target = $region29
  $region28: #{vq_gae_forward.1} parent=0 // pred_region
    _
  $region29: #{vq_gae_forward.1} parent=0 // pred_fallthru
    _
  // Predicated region
  $region30: #{vq_gae_forward.1} parent=0 // pred_check
    _
  $region31: #{vq_gae_forward.1} parent=0 // pred_check_branch
    %34 = sbr.rel (0) target = $region33
  $region32: #{vq_gae_forward.1} parent=0 // pred_region
    _
  $region33: #{vq_gae_forward.1} parent=0 // pred_fallthru
    _
  // Predicated region
  $region34: #{vq_gae_forward.1} parent=0 // pred_check
    _
  $region35: #{vq_gae_forward.1} parent=0 // pred_check_branch
    %36 = sbr.rel (0) target = $region37
  $region36: #{vq_gae_forward.1} parent=0 // pred_region
    _
  $region37: #{vq_gae_forward.1} parent=0 // pred_fallthru
    _
  // Predicated region
  $region38: #{vq_gae_forward.1} parent=0 // pred_check
    _
  $region39: #{vq_gae_forward.1} parent=0 // pred_check_branch
    %38 = sbr.rel (0) target = $region41
  $region40: #{vq_gae_forward.1} parent=0 // pred_region
    _
  $region41: #{vq_gae_forward.1} parent=0 // pred_fallthru
    _
  // Predicated region
  $region42: #{vq_gae_forward.1} parent=0 // pred_check
    _
  $region43: #{vq_gae_forward.1} parent=0 // pred_check_branch
    %40 = sbr.rel (0) target = $region45
  $region44: #{vq_gae_forward.1} parent=0 // pred_region
    _
  $region45: #{vq_gae_forward.1} parent=0 // pred_fallthru
    _
  %v41 = vld [vmem:[%s0] sm:$0xf]
  %v42 = vld [vmem:[%s1] sm:$0xff]
  %v43 = vld [vmem:[%s1 + $0x8] sm:$0xff]
  %v44 = vld [vmem:[%s1 + $0x10] sm:$0xff]
  %v45 = vld [vmem:[%s1 + $0x18] sm:$0xff]
  %v46 = vld [vmem:[%s1 + $0x20] sm:$0xff]
  %v47 = vld [vmem:[%s1 + $0x28] sm:$0xff]
  %v48 = vld [vmem:[%s1 + $0x30] sm:$0xff]
  %v49 = vld [vmem:[%s1 + $0x38] sm:$0xff]
  %v50 = vld [vmem:[%s1 + $0x40] sm:$0xff]
  %v51 = vld [vmem:[%s1 + $0x48] sm:$0xff]
  %v52 = vld [vmem:[%s1 + $0x50] sm:$0xff]
  %v53 = vld [vmem:[%s1 + $0x58] sm:$0xff]
  %v54 = vld [vmem:[%s1 + $0x60] sm:$0xff]
  %v55 = vld [vmem:[%s1 + $0x68] sm:$0xff]
  %v56 = vld [vmem:[%s1 + $0x70] sm:$0xff]
  %v57 = vld [vmem:[%s1 + $0x78] sm:$0xff]
  %v58 = vld [vmem:[%s1 + $0x80] sm:$0xff]
  %v59 = vld [vmem:[%s1 + $0x88] sm:$0xff]
  %v60 = vld [vmem:[%s1 + $0x90] sm:$0xff]
  %v61 = vld [vmem:[%s1 + $0x98] sm:$0xff]
  %v62 = vld [vmem:[%s1 + $0xa0] sm:$0xff]
  %v63 = vld [vmem:[%s1 + $0xa8] sm:$0xff]
  %v64 = vld [vmem:[%s1 + $0xb0] sm:$0xff]
  %v65 = vld [vmem:[%s1 + $0xb8] sm:$0xff]
  %v66 = vld [vmem:[%s1 + $0xc0] sm:$0xff]
  %v67 = vld [vmem:[%s1 + $0xc8] sm:$0xff]
  %v68 = vld [vmem:[%s1 + $0xd0] sm:$0xff]
  %v69 = vld [vmem:[%s1 + $0xd8] sm:$0xff]
  %v70 = vld [vmem:[%s1 + $0xe0] sm:$0xff]
  %v71 = vld [vmem:[%s1 + $0xe8] sm:$0xff]
  %v72 = vld [vmem:[%s1 + $0xf0] sm:$0xff]
  %v73 = vld [vmem:[%s1 + $0xf8] sm:$0xff]
  %v74 = vld [vmem:[%s2] sm:$0x1]
  %v76 = vperm.slane %v74, 0
  %79 = vst [vmem:[#allocation1] ss:$4 sm:$0xff] %v41
  %v80 = vld.sshfl [vmem:[#allocation1] sm:$0xff pattern:$0x73625140]
  %v81 = vld.sshfl [vmem:[#allocation1 + $0x8] sm:$0xff pattern:$0x73625140]
  %84 = vmatpush.msra.mxu0 %v57
  %85 = vmatpush.msra.mxu0 %v56
  %86 = vmatpush.msra.mxu0 %v55
  %87 = vmatpush.msra.mxu0 %v54
  %88 = vmatpush.msra.mxu0 %v53
  %89 = vmatpush.msra.mxu0 %v52
  %90 = vmatpush.msra.mxu0 %v51
  %91 = vmatpush.msra.mxu0 %v50
  %92 = vmatpush.msra.mxu0 %v49
  %93 = vmatpush.msra.mxu0 %v48
  %94 = vmatpush.msra.mxu0 %v47
  %95 = vmatpush.msra.mxu0 %v46
  %96 = vmatpush.msra.mxu0 %v45
  %97 = vmatpush.msra.mxu0 %v44
  %98 = vmatpush.msra.mxu0 %v43
  %99 = vmatpush.msra.mxu0 %v42
  %100 = vmatmul.f32.gmra.mxu0 %v80
  %v101 = vpop.f32.mrf.mxu0
  %v102 = vadd.f32 %v76, %v101
  %103 = vdwg.mxu0
  %104 = vmatpush.msra.mxu0 %v73
  %105 = vmatpush.msra.mxu0 %v72
  %106 = vmatpush.msra.mxu0 %v71
  %107 = vmatpush.msra.mxu0 %v70
  %108 = vmatpush.msra.mxu0 %v69
  %109 = vmatpush.msra.mxu0 %v68
  %110 = vmatpush.msra.mxu0 %v67
  %111 = vmatpush.msra.mxu0 %v66
  %112 = vmatpush.msra.mxu0 %v65
  %113 = vmatpush.msra.mxu0 %v64
  %114 = vmatpush.msra.mxu0 %v63
  %115 = vmatpush.msra.mxu0 %v62
  %116 = vmatpush.msra.mxu0 %v61
  %117 = vmatpush.msra.mxu0 %v60
  %118 = vmatpush.msra.mxu0 %v59
  %119 = vmatpush.msra.mxu0 %v58
  %120 = vmatmul.f32.gmra.mxu0 %v81
  %v121 = vpop.f32.mrf.mxu0
  %v122 = vadd.f32 %v102, %v121
  %123 = vdwg.mxu0
  %v124 = vmax.f32 %v122, 0.0
  %v125 = vld [vmem:[%s3] sm:$0xff]
  %v126 = vld [vmem:[%s3 + $0x8] sm:$0xff]
  %v127 = vld [vmem:[%s3 + $0x10] sm:$0xff]
  %v128 = vld [vmem:[%s3 + $0x18] sm:$0xff]
  %v129 = vld [vmem:[%s3 + $0x20] sm:$0xff]
  %v130 = vld [vmem:[%s3 + $0x28] sm:$0xff]
  %v131 = vld [vmem:[%s3 + $0x30] sm:$0xff]
  %v132 = vld [vmem:[%s3 + $0x38] sm:$0xff]
  %v133 = vld [vmem:[%s3 + $0x40] sm:$0xff]
  %v134 = vld [vmem:[%s3 + $0x48] sm:$0xff]
  %v135 = vld [vmem:[%s3 + $0x50] sm:$0xff]
  %v136 = vld [vmem:[%s3 + $0x58] sm:$0xff]
  %v137 = vld [vmem:[%s3 + $0x60] sm:$0xff]
  %v138 = vld [vmem:[%s3 + $0x68] sm:$0xff]
  %v139 = vld [vmem:[%s3 + $0x70] sm:$0xff]
  %v140 = vld [vmem:[%s3 + $0x78] sm:$0xff]
  %v141 = vld [vmem:[%s4] sm:$0x1]
  %v143 = vperm.slane %v141, 0
  %145 = vmatpush.msra.mxu0 %v140
  %146 = vmatpush.msra.mxu0 %v139
  %147 = vmatpush.msra.mxu0 %v138
  %148 = vmatpush.msra.mxu0 %v137
  %149 = vmatpush.msra.mxu0 %v136
  %150 = vmatpush.msra.mxu0 %v135
  %151 = vmatpush.msra.mxu0 %v134
  %152 = vmatpush.msra.mxu0 %v133
  %153 = vmatpush.msra.mxu0 %v132
  %154 = vmatpush.msra.mxu0 %v131
  %155 = vmatpush.msra.mxu0 %v130
  %156 = vmatpush.msra.mxu0 %v129
  %157 = vmatpush.msra.mxu0 %v128
  %158 = vmatpush.msra.mxu0 %v127
  %159 = vmatpush.msra.mxu0 %v126
  %160 = vmatpush.msra.mxu0 %v125
  %161 = vmatmul.f32.gmra.mxu0 %v124
  %v162 = vpop.f32.mrf.mxu0
  %v163 = vadd.f32 %v143, %v162
  %164 = vdwg.mxu0
  %165 = vst [vmem:[%s12] sm:$0x3] %v163
  %v166 = vld [vmem:[%s5] sm:$0xff]
  %v167 = vld [vmem:[%s5 + $0x8] sm:$0xff]
  %v168 = vld [vmem:[%s5 + $0x10] sm:$0xff]
  %v169 = vld [vmem:[%s5 + $0x18] sm:$0xff]
  %v170 = vld [vmem:[%s5 + $0x20] sm:$0xff]
  %v171 = vld [vmem:[%s5 + $0x28] sm:$0xff]
  %v172 = vld [vmem:[%s5 + $0x30] sm:$0xff]
  %v173 = vld [vmem:[%s5 + $0x38] sm:$0xff]
  %v174 = vld [vmem:[%s5 + $0x40] sm:$0xff]
  %v175 = vld [vmem:[%s5 + $0x48] sm:$0xff]
  %v176 = vld [vmem:[%s5 + $0x50] sm:$0xff]
  %v177 = vld [vmem:[%s5 + $0x58] sm:$0xff]
  %v178 = vld [vmem:[%s5 + $0x60] sm:$0xff]
  %v179 = vld [vmem:[%s5 + $0x68] sm:$0xff]
  %v180 = vld [vmem:[%s5 + $0x70] sm:$0xff]
  %v181 = vld [vmem:[%s5 + $0x78] sm:$0xff]
  %v182 = vld [vmem:[%s5 + $0x80] sm:$0xff]
  %v183 = vld [vmem:[%s5 + $0x88] sm:$0xff]
  %v184 = vld [vmem:[%s5 + $0x90] sm:$0xff]
  %v185 = vld [vmem:[%s5 + $0x98] sm:$0xff]
  %v186 = vld [vmem:[%s5 + $0xa0] sm:$0xff]
  %v187 = vld [vmem:[%s5 + $0xa8] sm:$0xff]
  %v188 = vld [vmem:[%s5 + $0xb0] sm:$0xff]
  %v189 = vld [vmem:[%s5 + $0xb8] sm:$0xff]
  %v190 = vld [vmem:[%s5 + $0xc0] sm:$0xff]
  %v191 = vld [vmem:[%s5 + $0xc8] sm:$0xff]
  %v192 = vld [vmem:[%s5 + $0xd0] sm:$0xff]
  %v193 = vld [vmem:[%s5 + $0xd8] sm:$0xff]
  %v194 = vld [vmem:[%s5 + $0xe0] sm:$0xff]
  %v195 = vld [vmem:[%s5 + $0xe8] sm:$0xff]
  %v196 = vld [vmem:[%s5 + $0xf0] sm:$0xff]
  %v197 = vld [vmem:[%s5 + $0xf8] sm:$0xff]
  %198 = vmatpush.msra.mxu0 %v196
  %199 = vmatpush.msra.mxu0 %v194
  %200 = vmatpush.msra.mxu0 %v192
  %201 = vmatpush.msra.mxu0 %v190
  %202 = vmatpush.msra.mxu0 %v188
  %203 = vmatpush.msra.mxu0 %v186
  %204 = vmatpush.msra.mxu0 %v184
  %205 = vmatpush.msra.mxu0 %v182
  %206 = vmatpush.msra.mxu0 %v180
  %207 = vmatpush.msra.mxu0 %v178
  %208 = vmatpush.msra.mxu0 %v176
  %209 = vmatpush.msra.mxu0 %v174
  %210 = vmatpush.msra.mxu0 %v172
  %211 = vmatpush.msra.mxu0 %v170
  %212 = vmatpush.msra.mxu0 %v168
  %213 = vmatpush.msra.mxu0 %v166
  %214 = vmatmul.f32.gmra.mxu0 %v163
  %v215 = vpop.f32.mrf.mxu0
  %v216 = vadd.f32 0.0, %v215
  %217 = vdwg.mxu0
  %218 = vmatpush.msra.mxu0 %v197
  %219 = vmatpush.msra.mxu0 %v195
  %220 = vmatpush.msra.mxu0 %v193
  %221 = vmatpush.msra.mxu0 %v191
  %222 = vmatpush.msra.mxu0 %v189
  %223 = vmatpush.msra.mxu0 %v187
  %224 = vmatpush.msra.mxu0 %v185
  %225 = vmatpush.msra.mxu0 %v183
  %226 = vmatpush.msra.mxu0 %v181
  %227 = vmatpush.msra.mxu0 %v179
  %228 = vmatpush.msra.mxu0 %v177
  %229 = vmatpush.msra.mxu0 %v175
  %230 = vmatpush.msra.mxu0 %v173
  %231 = vmatpush.msra.mxu0 %v171
  %232 = vmatpush.msra.mxu0 %v169
  %233 = vmatpush.msra.mxu0 %v167
  %234 = vmatmul.f32.gmra.mxu0 %v163
  %v235 = vpop.f32.mrf.mxu0
  %v236 = vadd.f32 0.0, %v235
  %237 = vdwg.mxu0
  %v238 = vld [vmem:[%s6] sm:$0x3]
  %v239 = vmul.f32 %v216, 2.0
  %v240 = vmul.f32 %v236, 2.0
  %v242 = vperm.slane %v238, 0
  %v243 = vperm.slane %v238, 1
  %v246 = vsub.f32 %v242, %v239
  %v247 = vsub.f32 %v243, %v240
  %249 = vrot.lane.b32.xlu0 %v246, 96
  %v250 = vpop.permute.xlu0 %249
  %252 = vrot.lane.b32.xlu0 %v246, 64
  %v253 = vpop.permute.xlu0 %252
  %255 = vrot.lane.b32.xlu0 %v246, 32
  %v256 = vpop.permute.xlu0 %255
  %259 = vrot.lane.b32.xlu0 %v247, 96
  %v260 = vpop.permute.xlu0 %259
  %262 = vrot.lane.b32.xlu0 %v247, 64
  %v263 = vpop.permute.xlu0 %262
  %265 = vrot.lane.b32.xlu0 %v247, 32
  %v266 = vpop.permute.xlu0 %265
  %v268 = vrot.slane %v253, 4
  %vm269 = vcmask 1047556
  %v270 = vsel %vm269, %v268, %v246
  %v272 = vunpack.c.l.s4 1983009808
  %v273 = vunpack.c.0.s8 %v272
  %v274 = vperm.slane %v270, %v273
  %v275 = vrot.slane %v256, 4
  %v276 = vsel %vm269, %v275, %v250
  %v278 = vunpack.c.l.s4 1983009808
  %v279 = vunpack.c.0.s8 %v278
  %v280 = vperm.slane %v276, %v279
  %v281 = vrot.slane %v263, 4
  %v282 = vsel %vm269, %v281, %v247
  %v284 = vunpack.c.l.s4 1983009808
  %v285 = vunpack.c.0.s8 %v284
  %v286 = vperm.slane %v282, %v285
  %v287 = vrot.slane %v266, 4
  %v288 = vsel %vm269, %v287, %v260
  %v290 = vunpack.c.l.s4 1983009808
  %v291 = vunpack.c.0.s8 %v290
  %v292 = vperm.slane %v288, %v291
  %v293 = vrot.slane %v280, 4
  %v294 = vsel %vm269, %v293, %v274
  %v296 = vunpack.c.l.s4 1934713408
  %v297 = vunpack.c.0.s8 %v296
  %v298 = vperm.slane %v294, %v297
  %v299 = vrot.slane %v292, 4
  %v300 = vsel %vm269, %v299, %v286
  %v302 = vunpack.c.l.s4 1934713408
  %v303 = vunpack.c.0.s8 %v302
  %v304 = vperm.slane %v300, %v303
  %v305 = vrot.slane %v304, 4
  %v306 = vsel %vm269, %v305, %v298
  %v307 = vrot.slane %v298, 4
  %v308 = vsel %vm269, %v304, %v307
  %v309 = vlaneseq
  %v310 = vand.u32 %v309, 127
  %vm311 = vcmask 261120
  %v312 = vsel %vm311, %v306, inf
  %313 = vmin.xlane.f32.xlu0 %v312
  %v314 = vpop.xlane.xlu0 %313
  %v315 = vsel %vm311, %v308, inf
  %316 = vmin.xlane.f32.xlu0 %v315
  %v317 = vpop.xlane.xlu0 %316
  %vm318 = vcmp.le.f32.partialorder %v306, %v314
  %vm319 = vcmp.le.f32.partialorder %v308, %v317
  %v320 = vsel %vm318, %v310, 32
  %v321 = vsel %vm319, %v310, 32
  %v322 = vsel %vm311, %v320, 2147483647
  %v323 = vand.u32 %v322, 65535
  %v324 = vshra.s32 %v322, 16
  %v325 = vcvt.s32.f32 %v323
  %v326 = vcvt.s32.f32 %v324
  %327 = vmin.xlane.f32.xlu0 %v326
  %v328 = vpop.xlane.xlu0 %327
  %vm329 = vcmp.eq.f32.partialorder %v326, %v328
  %v330 = vsel %vm329, %v325, inf
  %331 = vmin.xlane.f32.xlu0 %v330
  %v332 = vpop.xlane.xlu0 %331
  %v333 = vcvt.f32.s32 %v332
  %v334 = vcvt.f32.s32 %v328
  %v335 = vshll.u32 %v334, 16
  %v336 = vadd.s32 %v335, %v333
  %v337 = vsel %vm311, %v321, 2147483647
  %v338 = vand.u32 %v337, 65535
  %v339 = vshra.s32 %v337, 16
  %v340 = vcvt.s32.f32 %v338
  %v341 = vcvt.s32.f32 %v339
  %342 = vmin.xlane.f32.xlu0 %v341
  %v343 = vpop.xlane.xlu0 %342
  %vm344 = vcmp.eq.f32.partialorder %v341, %v343
  %v345 = vsel %vm344, %v340, inf
  %346 = vmin.xlane.f32.xlu0 %v345
  %v347 = vpop.xlane.xlu0 %346
  %v348 = vcvt.f32.s32 %v347
  %v349 = vcvt.f32.s32 %v343
  %v350 = vshll.u32 %v349, 16
  %v351 = vadd.s32 %v350, %v348
  %vm352 = vcmp.eq.s32.totalorder %v310, %v336
  %vm353 = vcmp.eq.s32.totalorder %v310, %v351
  %v354 = vsel %vm352, 1, 0
  %v355 = vsel %vm353, 1, 0
  %v356 = vcvt.s32.f32 %v354
  %v357 = vcvt.s32.f32 %v355
  %v358 = vrot.slane %v356, 4
  %v359 = vsel %vm269, 0.0, %v358
  %v361 = vunpack.c.l.s4 1983009808
  %v362 = vunpack.c.0.s8 %v361
  %v363 = vperm.slane %v356, %v362
  %v365 = vunpack.c.l.s4 1983009808
  %v366 = vunpack.c.0.s8 %v365
  %v367 = vperm.slane %v359, %v366
  %v368 = vrot.slane %v357, 4
  %v369 = vsel %vm269, 0.0, %v368
  %v371 = vunpack.c.l.s4 1983009808
  %v372 = vunpack.c.0.s8 %v371
  %v373 = vperm.slane %v357, %v372
  %v375 = vunpack.c.l.s4 1983009808
  %v376 = vunpack.c.0.s8 %v375
  %v377 = vperm.slane %v369, %v376
  %v378 = vrot.slane %v373, 4
  %v379 = vsel %vm269, %v378, %v363
  %v380 = vrot.slane %v363, 4
  %v381 = vsel %vm269, %v373, %v380
  %v383 = vunpack.c.l.s4 1934713408
  %v384 = vunpack.c.0.s8 %v383
  %v385 = vperm.slane %v379, %v384
  %v387 = vunpack.c.l.s4 1934713408
  %v388 = vunpack.c.0.s8 %v387
  %v389 = vperm.slane %v381, %v388
  %v390 = vrot.slane %v377, 4
  %v391 = vsel %vm269, %v390, %v367
  %v392 = vrot.slane %v367, 4
  %v393 = vsel %vm269, %v377, %v392
  %v395 = vunpack.c.l.s4 1934713408
  %v396 = vunpack.c.0.s8 %v395
  %v397 = vperm.slane %v391, %v396
  %v399 = vunpack.c.l.s4 1934713408
  %v400 = vunpack.c.0.s8 %v399
  %v401 = vperm.slane %v393, %v400
  %v402 = vrot.slane %v385, 4
  %v403 = vsel %vm269, 0.0, %v402
  %v404 = vrot.slane %v389, 4
  %v405 = vsel %vm269, 0.0, %v404
  %v406 = vrot.slane %v397, 4
  %v407 = vsel %vm269, 0.0, %v406
  %v408 = vrot.slane %v401, 4
  %v409 = vsel %vm269, 0.0, %v408
  %411 = vrot.lane.b32.xlu0 %v403, 32
  %v412 = vpop.permute.xlu0 %411
  %415 = vrot.lane.b32.xlu0 %v389, 64
  %v416 = vpop.permute.xlu0 %415
  %419 = vrot.lane.b32.xlu0 %v405, 96
  %v420 = vpop.permute.xlu0 %419
  %423 = vrot.lane.b32.xlu0 %v407, 32
  %v424 = vpop.permute.xlu0 %423
  %427 = vrot.lane.b32.xlu0 %v401, 64
  %v428 = vpop.permute.xlu0 %427
  %431 = vrot.lane.b32.xlu0 %v409, 96
  %v432 = vpop.permute.xlu0 %431
  %v434 = vsel %vm311, %v385, %v412
  %vm435 = vcmask 523264
  %v436 = vsel %vm435, %v434, %v416
  %vm437 = vcmask 785408
  %v438 = vsel %vm437, %v436, %v420
  %v439 = vsel %vm311, %v397, %v424
  %v440 = vsel %vm435, %v439, %v428
  %v441 = vsel %vm437, %v440, %v432
  %442 = vmatpush.xpose.msra.mxu0 %v196
  %443 = vmatpush.xpose.msra.mxu0 %v194
  %444 = vmatpush.xpose.msra.mxu0 %v192
  %445 = vmatpush.xpose.msra.mxu0 %v190
  %446 = vmatpush.xpose.msra.mxu0 %v188
  %447 = vmatpush.xpose.msra.mxu0 %v186
  %448 = vmatpush.xpose.msra.mxu0 %v184
  %449 = vmatpush.xpose.msra.mxu0 %v182
  %450 = vmatpush.xpose.msra.mxu0 %v180
  %451 = vmatpush.xpose.msra.mxu0 %v178
  %452 = vmatpush.xpose.msra.mxu0 %v176
  %453 = vmatpush.xpose.msra.mxu0 %v174
  %454 = vmatpush.xpose.msra.mxu0 %v172
  %455 = vmatpush.xpose.msra.mxu0 %v170
  %456 = vmatpush.xpose.msra.mxu0 %v168
  %457 = vmatpush.xpose.msra.mxu0 %v166
  %458 = vmatmul.f32.gmra.mxu0 %v438
  %v459 = vpop.f32.mrf.mxu0
  %v460 = vadd.f32 0.0, %v459
  %461 = vdwg.mxu0
  %462 = vmatpush.xpose.msra.mxu0 %v197
  %463 = vmatpush.xpose.msra.mxu0 %v195
  %464 = vmatpush.xpose.msra.mxu0 %v193
  %465 = vmatpush.xpose.msra.mxu0 %v191
  %466 = vmatpush.xpose.msra.mxu0 %v189
  %467 = vmatpush.xpose.msra.mxu0 %v187
  %468 = vmatpush.xpose.msra.mxu0 %v185
  %469 = vmatpush.xpose.msra.mxu0 %v183
  %470 = vmatpush.xpose.msra.mxu0 %v181
  %471 = vmatpush.xpose.msra.mxu0 %v179
  %472 = vmatpush.xpose.msra.mxu0 %v177
  %473 = vmatpush.xpose.msra.mxu0 %v175
  %474 = vmatpush.xpose.msra.mxu0 %v173
  %475 = vmatpush.xpose.msra.mxu0 %v171
  %476 = vmatpush.xpose.msra.mxu0 %v169
  %477 = vmatpush.xpose.msra.mxu0 %v167
  %478 = vmatmul.f32.gmra.mxu0 %v441
  %v479 = vpop.f32.mrf.mxu0
  %v480 = vadd.f32 %v460, %v479
  %481 = vdwg.mxu0
  %v482 = vsub.f32 %v480, %v163
  %v483 = vmul.f32 %v482, %v482
  %vm484 = vcmask 1041408
  %v485 = vsel %vm484, %v483, 0.0
  %486 = vadd.xlane.f32.xlu0 %v485
  %v487 = vpop.xlane.xlu0 %486
  %v488 = vrot.slane %v487, 4
  %v489 = vadd.f32 %v487, %v488
  %v490 = vrot.slane %v489, 2
  %v491 = vadd.f32 %v489, %v490
  %v492 = vrot.slane %v491, 1
  %v493 = vadd.f32 %v491, %v492
  %s494 = vtos %v493
  %v495 = vrcp.pop 256.0
  %v496 = vmul.f32 256.0, %v495
  %v497 = vsub.f32 1.0, %v496
  %v498 = vmul.f32 %v495, %v497
  %v499 = vadd.f32 %v495, %v498
  %vm500 = vweird.f32 %v495
  %v501 = vsel %vm500, %v495, %v499
  %s502 = vtos %v501
  %s503 = smul.f32 %s494, %s502
  %s504 = smul.f32 %s503, 1.25
  %v505 = vsel %vm311, %v356, 0.0
  %v506 = vsel %vm311, %v357, 0.0
  %v507 = vadd.f32 %v505, %v506
  %v508 = vsel %vm311, %v507, 0.0
  %v509 = vrot.slane %v508, 4
  %v510 = vadd.f32 %v508, %v509
  %v511 = vrot.slane %v510, 2
  %v512 = vadd.f32 %v510, %v511
  %v513 = vrot.slane %v512, 1
  %v514 = vadd.f32 %v512, %v513
  %v515 = vmul.f32 %v514, 0.0625
  %v516 = vadd.f32 %v515, 1e-10
  %v517 = vlog2.pop %v516
  %v518 = vmul.f32 %v517, 0.6931472
  %v519 = vmul.f32 %v515, %v518
  %vm520 = vcmask 253952
  %v521 = vsel %vm520, %v519, 0.0
  %522 = vadd.xlane.f32.xlu0 %v521
  %v523 = vpop.xlane.xlu0 %522
  %v524 = vrot.slane %v523, 4
  %v525 = vadd.f32 %v523, %v524
  %v526 = vrot.slane %v525, 2
  %v527 = vadd.f32 %v525, %v526
  %v528 = vrot.slane %v527, 1
  %v529 = vadd.f32 %v527, %v528
  %s530 = vtos %v529
  %s531 = ssub.f32 0.0, %s530
  %v532 = vstv %s531
  %v533 = vmul.f32 %v532, 1.442695
  %v534 = vpow.pop %v533
  %s535 = vtos %v534
  %v536 = vld [vmem:[%s7] sm:$0xff]
  %v537 = vld [vmem:[%s7 + $0x8] sm:$0xff]
  %v538 = vld [vmem:[%s7 + $0x10] sm:$0xff]
  %v539 = vld [vmem:[%s7 + $0x18] sm:$0xff]
  %v540 = vld [vmem:[%s7 + $0x20] sm:$0xff]
  %v541 = vld [vmem:[%s7 + $0x28] sm:$0xff]
  %v542 = vld [vmem:[%s7 + $0x30] sm:$0xff]
  %v543 = vld [vmem:[%s7 + $0x38] sm:$0xff]
  %v544 = vld [vmem:[%s7 + $0x40] sm:$0xff]
  %v545 = vld [vmem:[%s7 + $0x48] sm:$0xff]
  %v546 = vld [vmem:[%s7 + $0x50] sm:$0xff]
  %v547 = vld [vmem:[%s7 + $0x58] sm:$0xff]
  %v548 = vld [vmem:[%s7 + $0x60] sm:$0xff]
  %v549 = vld [vmem:[%s7 + $0x68] sm:$0xff]
  %v550 = vld [vmem:[%s7 + $0x70] sm:$0xff]
  %v551 = vld [vmem:[%s7 + $0x78] sm:$0xff]
  %v552 = vld [vmem:[%s8] sm:$0x1]
  %v554 = vperm.slane %v552, 0
  %556 = vmatpush.msra.mxu0 %v551
  %557 = vmatpush.msra.mxu0 %v550
  %558 = vmatpush.msra.mxu0 %v549
  %559 = vmatpush.msra.mxu0 %v548
  %560 = vmatpush.msra.mxu0 %v547
  %561 = vmatpush.msra.mxu0 %v546
  %562 = vmatpush.msra.mxu0 %v545
  %563 = vmatpush.msra.mxu0 %v544
  %564 = vmatpush.msra.mxu0 %v543
  %565 = vmatpush.msra.mxu0 %v542
  %566 = vmatpush.msra.mxu0 %v541
  %567 = vmatpush.msra.mxu0 %v540
  %568 = vmatpush.msra.mxu0 %v539
  %569 = vmatpush.msra.mxu0 %v538
  %570 = vmatpush.msra.mxu0 %v537
  %571 = vmatpush.msra.mxu0 %v536
  %572 = vmatmul.f32.gmra.mxu0 %v480
  %v573 = vpop.f32.mrf.mxu0
  %v574 = vadd.f32 %v554, %v573
  %575 = vdwg.mxu0
  %v576 = vmax.f32 %v574, 0.0
  %v577 = vld [vmem:[%s9] sm:$0xff]
  %v578 = vld [vmem:[%s9 + $0x8] sm:$0xff]
  %v579 = vld [vmem:[%s9 + $0x10] sm:$0xff]
  %v580 = vld [vmem:[%s9 + $0x18] sm:$0xff]
  %v581 = vld [vmem:[%s9 + $0x20] sm:$0xff]
  %v582 = vld [vmem:[%s9 + $0x28] sm:$0xff]
  %v583 = vld [vmem:[%s9 + $0x30] sm:$0xff]
  %v584 = vld [vmem:[%s9 + $0x38] sm:$0xff]
  %v585 = vld [vmem:[%s9 + $0x40] sm:$0xff]
  %v586 = vld [vmem:[%s9 + $0x48] sm:$0xff]
  %v587 = vld [vmem:[%s9 + $0x50] sm:$0xff]
  %v588 = vld [vmem:[%s9 + $0x58] sm:$0xff]
  %v589 = vld [vmem:[%s9 + $0x60] sm:$0xff]
  %v590 = vld [vmem:[%s9 + $0x68] sm:$0xff]
  %v591 = vld [vmem:[%s9 + $0x70] sm:$0xff]
  %v592 = vld [vmem:[%s9 + $0x78] sm:$0xff]
  %v593 = vld [vmem:[%s9 + $0x80] sm:$0xff]
  %v594 = vld [vmem:[%s9 + $0x88] sm:$0xff]
  %v595 = vld [vmem:[%s9 + $0x90] sm:$0xff]
  %v596 = vld [vmem:[%s9 + $0x98] sm:$0xff]
  %v597 = vld [vmem:[%s9 + $0xa0] sm:$0xff]
  %v598 = vld [vmem:[%s9 + $0xa8] sm:$0xff]
  %v599 = vld [vmem:[%s9 + $0xb0] sm:$0xff]
  %v600 = vld [vmem:[%s9 + $0xb8] sm:$0xff]
  %v601 = vld [vmem:[%s9 + $0xc0] sm:$0xff]
  %v602 = vld [vmem:[%s9 + $0xc8] sm:$0xff]
  %v603 = vld [vmem:[%s9 + $0xd0] sm:$0xff]
  %v604 = vld [vmem:[%s9 + $0xd8] sm:$0xff]
  %v605 = vld [vmem:[%s9 + $0xe0] sm:$0xff]
  %v606 = vld [vmem:[%s9 + $0xe8] sm:$0xff]
  %v607 = vld [vmem:[%s9 + $0xf0] sm:$0xff]
  %v608 = vld [vmem:[%s9 + $0xf8] sm:$0xff]
  %v609 = vld [vmem:[%s10] sm:$0x3]
  %v611 = vperm.slane %v609, 0
  %v612 = vperm.slane %v609, 1
  %615 = vmatpush.msra.mxu0 %v607
  %616 = vmatpush.msra.mxu0 %v605
  %617 = vmatpush.msra.mxu0 %v603
  %618 = vmatpush.msra.mxu0 %v601
  %619 = vmatpush.msra.mxu0 %v599
  %620 = vmatpush.msra.mxu0 %v597
  %621 = vmatpush.msra.mxu0 %v595
  %622 = vmatpush.msra.mxu0 %v593
  %623 = vmatpush.msra.mxu0 %v591
  %624 = vmatpush.msra.mxu0 %v589
  %625 = vmatpush.msra.mxu0 %v587
  %626 = vmatpush.msra.mxu0 %v585
  %627 = vmatpush.msra.mxu0 %v583
  %628 = vmatpush.msra.mxu0 %v581
  %629 = vmatpush.msra.mxu0 %v579
  %630 = vmatpush.msra.mxu0 %v577
  %631 = vmatmul.f32.gmra.mxu0 %v576
  %v632 = vpop.f32.mrf.mxu0
  %v633 = vadd.f32 %v611, %v632
  %634 = vdwg.mxu0
  %635 = vmatpush.msra.mxu0 %v608
  %636 = vmatpush.msra.mxu0 %v606
  %637 = vmatpush.msra.mxu0 %v604
  %638 = vmatpush.msra.mxu0 %v602
  %639 = vmatpush.msra.mxu0 %v600
  %640 = vmatpush.msra.mxu0 %v598
  %641 = vmatpush.msra.mxu0 %v596
  %642 = vmatpush.msra.mxu0 %v594
  %643 = vmatpush.msra.mxu0 %v592
  %644 = vmatpush.msra.mxu0 %v590
  %645 = vmatpush.msra.mxu0 %v588
  %646 = vmatpush.msra.mxu0 %v586
  %647 = vmatpush.msra.mxu0 %v584
  %648 = vmatpush.msra.mxu0 %v582
  %649 = vmatpush.msra.mxu0 %v580
  %650 = vmatpush.msra.mxu0 %v578
  %651 = vmatmul.f32.gmra.mxu0 %v576
  %v652 = vpop.f32.mrf.mxu0
  %v653 = vadd.f32 %v612, %v652
  %654 = vdwg.mxu0
  %v657 = vrot.slane %v653, 6
  %v658 = vsel %vm484, %v633, %v657
  %660 = vst [vmem:[%s11] sm:$0xf] %v658
  %661 = vst [vmem:[#allocation1] ss:$4 sm:$0xff] %v41
  %v662 = vld.sshfl [vmem:[#allocation1] sm:$0xff pattern:$0x73625140]
  %v663 = vld.sshfl [vmem:[#allocation1 + $0x8] sm:$0xff pattern:$0x73625140]
  %v666 = vsub.f32 %v633, %v662
  %v667 = vsub.f32 %v653, %v663
  %v668 = vand.u32 2147483647, %v666
  %v669 = vand.u32 2147483647, %v667
  %v670 = vsel %vm484, %v668, 0.0
  %v671 = vsel %vm484, %v669, 0.0
  %v672 = vadd.f32 %v670, %v671
  %673 = vadd.xlane.f32.xlu0 %v672
  %v674 = vpop.xlane.xlu0 %673
  %v675 = vrot.slane %v674, 4
  %v676 = vadd.f32 %v674, %v675
  %v677 = vrot.slane %v676, 2
  %v678 = vadd.f32 %v676, %v677
  %v679 = vrot.slane %v678, 1
  %v680 = vadd.f32 %v678, %v679
  %s681 = vtos %v680
  %v682 = vrcp.pop 512.0
  %v683 = vmul.f32 512.0, %v682
  %v684 = vsub.f32 1.0, %v683
  %v685 = vmul.f32 %v682, %v684
  %v686 = vadd.f32 %v682, %v685
  %vm687 = vweird.f32 %v682
  %v688 = vsel %vm687, %v682, %v686
  %s689 = vtos %v688
  %s690 = smul.f32 %s681, %s689
  %vm691 = vcmp.eq.s32.totalorder %v310, 0
  %vm692 = vcmp.eq.s32.totalorder %v310, 1
  %vm693 = vcmp.eq.s32.totalorder %v310, 2
  %v694 = vstv %s535
  %v695 = vsel %vm693, %v694, 0.0
  %v696 = vstv %s690
  %v697 = vsel %vm692, %v696, %v695
  %v698 = vstv %s504
  %v699 = vsel %vm691, %v698, %v697
  %700 = vst [vmem:[%s13] sm:$0x1] %v699
  // Predicated region
  $region46: #{vq_gae_forward.1} parent=0 // pred_check
    _
  $region47: #{vq_gae_forward.1} parent=0 // pred_check_branch
    %702 = sbr.rel (0) target = $region49
  $region48: #{vq_gae_forward.1} parent=0 // pred_region
    _
  $region49: #{vq_gae_forward.1} parent=0 // pred_fallthru
    _
  // Predicated region
  $region50: #{vq_gae_forward.1} parent=0 // pred_check
    _
  $region51: #{vq_gae_forward.1} parent=0 // pred_check_branch
    %704 = sbr.rel (0) target = $region53
  $region52: #{vq_gae_forward.1} parent=0 // pred_region
    _
  $region53: #{vq_gae_forward.1} parent=0 // pred_fallthru
    _
  // Predicated region
  $region54: #{vq_gae_forward.1} parent=0 // pred_check
    _
  $region55: #{vq_gae_forward.1} parent=0 // pred_check_branch
    %706 = sbr.rel (0) target = $region57
  $region56: #{vq_gae_forward.1} parent=0 // pred_region
    _
  $region57: #{vq_gae_forward.1} parent=0 // pred_fallthru
    _
  // Predicated region
  $region58: #{vq_gae_forward.1} parent=0 // pred_check
    _
  $region59: #{vq_gae_forward.1} parent=0 // pred_check_branch
    %708 = sbr.rel (0) target = $region61
  $region60: #{vq_gae_forward.1} parent=0 // pred_region
    _
  $region61: #{vq_gae_forward.1} parent=0 // pred_fallthru
    _
  // Predicated region
  $region62: #{vq_gae_forward.1} parent=0 // pred_check
    _
  $region63: #{vq_gae_forward.1} parent=0 // pred_check_branch
    %710 = sbr.rel (0) target = $region65
  $region64: #{vq_gae_forward.1} parent=0 // pred_region
    _
  $region65: #{vq_gae_forward.1} parent=0 // pred_fallthru
    _
  // Predicated region
  $region66: #{vq_gae_forward.1} parent=0 // pred_check
    _
  $region67: #{vq_gae_forward.1} parent=0 // pred_check_branch
    %712 = sbr.rel (0) target = $region69
  $region68: #{vq_gae_forward.1} parent=0 // pred_region
    _
  $region69: #{vq_gae_forward.1} parent=0 // pred_fallthru
    _

</llo_original>
